<compile_context>
chip_gen: v6e
topology: v6e:2x2x1
jax: 0.10.0
libtpu: 0.0.40
codegen_flags: <defaults>
</compile_context>

<pallas_src>
import functools
import math

import jax
import jax.numpy as jnp
import numpy as np
from jax.experimental import pallas as pl
from jax.experimental.pallas import tpu as pltpu


# ----------------------------- Pallas kernel ------------------------------ #

def _focal_conv_kernel(x_ref, w_ref, o_ref, patch_ref, *, K, pad, Wp, L, PADL,
                       chunk_lanes, num_chunks, compute_dtype):
    """One grid step == one batch sample (all halving chunks at once).

    x_ref     : (1, C, L + 2*PADL)  host-zero-padded, W-padded activations
    w_ref     : (Co, K*K*C)         merged-tap weight matrix
    o_ref     : (1, Co, L)          conv output on the flattened lane layout
    patch_ref : (K*K*C, L)          VMEM scratch: masked im2col patch matrix
    """
    xt = x_ref[0].astype(compute_dtype)               # [C, L + 2*PADL]
    C = xt.shape[0]

    # Row-validity masks generated in-kernel (no HBM mask input / DMA):
    # tap row  h_local + kh - pad  must stay inside the chunk [0, Hc).
    # Expressed as per-chunk lane-interval tests -> only iota / compare / and.
    lane = jax.lax.broadcasted_iota(jnp.int32, (1, L), 1)

    def row_valid_mask(kh):
        d = kh - pad
        if d == 0:
            return None                               # center row: always valid
        width = min(abs(d) * Wp, chunk_lanes)
        bad = jnp.zeros((1, L), dtype=jnp.bool_)
        for j in range(num_chunks):
            if d < 0:                                 # first |d| rows of chunk
                lo = j * chunk_lanes
                hi = lo + width
            else:                                     # last d rows of chunk
                hi = (j + 1) * chunk_lanes
                lo = hi - width
            bad = bad | ((lane >= lo) & (lane < hi))
        return (~bad).astype(compute_dtype)           # (1, L), bcast over C

    # Build the masked im2col patch matrix [K*K*C, L] in the VMEM scratch.
    # Each tap is a static lane-shifted slice of the single padded VMEM copy.
    for kh in range(K):
        mask = row_valid_mask(kh)
        for kw in range(K):
            t = kh * K + kw
            delta = (kh - pad) * Wp + kw              # lane shift of this tap
            rhs = xt[:, PADL + delta:PADL + delta + L]        # [C, L]
            if mask is not None:
                # Zero taps that would cross a chunk boundary (FocalConv2d's
                # per-chunk zero padding) or the top/bottom of the sample.
                rhs = rhs * mask
            patch_ref[t * C:(t + 1) * C, :] = rhs

    # Single merged MXU matmul: [Co, K*K*C] @ [K*K*C, L], f32 accumulation.
    acc = jnp.dot(w_ref[...].astype(compute_dtype), patch_ref[...],
                  preferred_element_type=jnp.float32)         # [Co, L]
    o_ref[0] = acc.astype(o_ref.dtype)


# ------------------------------ wrapper ------------------------------------ #

def focal_conv2d_forward(x, weight, *, halving, padding=1, stride=1,
                         compute_dtype=jnp.float32):
    """x: [N, C, H, W] float32, weight: [Cout, Cin, K, K]. Returns NCHW."""
    N, C, H, W = x.shape
    Co, Ci, K, K2 = weight.shape
    assert Ci == C and K == K2
    assert stride == 1 and 2 * padding == K - 1, (
        "fused kernel implements the 'same' conv FocalConv2d is used with "
        "(stride=1, 2*padding == kernel_size-1)")
    # TODO(synk): general stride/padding would need an im2col-style fallback.

    num_chunks = 1 if halving == 0 else 2 ** halving
    assert H % num_chunks == 0, "demo assumes H divisible by 2**halving"
    Hc = H // num_chunks
    pad = padding

    # Pad the row width so the flattened lane axis L = H * Wp is a multiple of
    # 128 (lane-dense, unmasked output stores). Extra columns are junk.
    step = 128 // math.gcd(H, 128)
    Wp = -(-(W + 2 * pad) // step) * step
    L = H * Wp
    chunk_lanes = Hc * Wp
    # Lane padding (128-aligned) so every tap shift is a static in-bounds slice.
    PADL = -(-(pad * Wp + K) // 128) * 128
    Lp = L + 2 * PADL

    # Host prep: cheap zero-pads + free reshapes only (no patch-matrix blowup).
    xw = jnp.pad(x, ((0, 0), (0, 0), (0, 0), (pad, Wp - W - pad)))
    xf = jnp.pad(xw.reshape(N, C, L), ((0, 0), (0, 0), (PADL, PADL)))
    xf = xf.astype(compute_dtype)                       # bf16 halves HBM bytes
    # Merged-tap weight: w2d[o, (kh*K+kw)*C + c] = weight[o, c, kh, kw].
    w2d = weight.transpose(0, 2, 3, 1).reshape(Co, K * K * C).astype(compute_dtype)

    kernel = functools.partial(
        _focal_conv_kernel, K=K, pad=pad, Wp=Wp, L=L, PADL=PADL,
        chunk_lanes=chunk_lanes, num_chunks=num_chunks,
        compute_dtype=compute_dtype)

    flops = 2 * N * Co * (K * K * C) * L
    bytes_accessed = int(N * (C * Lp * xf.dtype.itemsize + Co * L * 4)
                         + w2d.size * w2d.dtype.itemsize)

    out = pl.pallas_call(
        kernel,
        out_shape=jax.ShapeDtypeStruct((N, Co, L), jnp.float32),
        grid=(N,),
        in_specs=[
            pl.BlockSpec((1, C, Lp), lambda n: (n, 0, 0)),
            pl.BlockSpec((Co, K * K * C), lambda n: (0, 0)),
        ],
        out_specs=pl.BlockSpec((1, Co, L), lambda n: (n, 0, 0)),
        scratch_shapes=[pltpu.VMEM((K * K * C, L), compute_dtype)],
        compiler_params=pltpu.CompilerParams(
            dimension_semantics=("parallel",),   # N=2 steps -> both v7x TCs
            vmem_limit_bytes=32 * 1024 * 1024,
        ),
        cost_estimate=pl.CostEstimate(
            flops=flops, transcendentals=0, bytes_accessed=bytes_accessed),
    )(xf, w2d)

    # Lanes are already in final NCHW row order; drop the junk columns per row.
    # TODO(synk): let the consumer accept the Wp-padded layout (or fuse this
    # slice into the next op) to avoid this output-sized HBM copy.
    return out.reshape(N, Co, H, Wp)[:, :, :, :W]


# ------------------------------ reference --------------------------------- #

def _ref_focal_conv2d(x, weight, *, halving, padding=1, stride=1):
    dn = jax.lax.conv_dimension_numbers(x.shape, weight.shape,
                                        ("NCHW", "OIHW", "NCHW"))

    def conv(z):
        return jax.lax.conv_general_dilated(
            z, weight, window_strides=(stride, stride),
            padding=[(padding, padding), (padding, padding)],
            dimension_numbers=dn)

    if halving == 0:
        return conv(x)
    H = x.shape[2]
    split = int(H // (2 ** halving))
    chunks = [x[:, :, i * split:(i + 1) * split, :] for i in range(H // split)]
    return jnp.concatenate([conv(c) for c in chunks], axis=2)


# --------------------------------- main ------------------------------------ #

if __name__ == "__main__":
    # FocalConv2d(in_channels=4, out_channels=8, kernel_size=3,
    #             halving=1, padding=1) on a (2, 4, 16, 16) input.
    in_channels, out_channels, kernel_size = 4, 8, 3
    padding = 1

    key = jax.random.PRNGKey(0)
    k1, k2 = jax.random.split(key)
    x = jax.random.normal(k1, (2, in_channels, 16, 16), dtype=jnp.float32)
    weight = jax.random.normal(
        k2, (out_channels, in_channels, kernel_size, kernel_size),
        dtype=jnp.float32) * 0.1

    for halving in (1, 0):   # exercise both the split path and the plain conv
        fwd = jax.jit(functools.partial(
            focal_conv2d_forward, halving=halving, padding=padding))
        out = jax.block_until_ready(fwd(x, weight))
        ref = _ref_focal_conv2d(x, weight, halving=halving, padding=padding)
        np.testing.assert_allclose(np.asarray(out), np.asarray(ref),
                                   rtol=1e-4, atol=1e-4)
        assert out.shape == (2, out_channels, 16, 16)

    print("KERNEL_OK")
</pallas_src>

<mosaic_0001>
module attributes {stable_mosaic.version = 11 : i64} {
  func.func @_focal_conv_kernel(%arg0: i32, %arg1: memref<1x4x640xf32, #tpu.memory_space<vmem>>, %arg2: memref<8x36xf32, #tpu.memory_space<vmem>>, %arg3: memref<1x8x384xf32, #tpu.memory_space<vmem>>, %arg4: memref<36x384xf32, #tpu.memory_space<vmem>>) attributes {dimension_semantics = [#tpu.dimension_semantics<parallel>], iteration_bounds = array<i64: 2>, scalar_prefetch = 0 : i64, scratch_operands = 1 : i64, tpu.core_type = #tpu.core_type<tc>, window_params = [{transform_indices = @transform_0, window_bounds = array<i64: 1, 4, 640>}, {pipeline_mode = #tpu.pipeline_mode<synchronous>, transform_indices = @transform_1, window_bounds = array<i64: 8, 36>}, {transform_indices = @transform_2, window_bounds = array<i64: 1, 8, 384>}]} {
    %c0 = arith.constant 0 : index
    %c0_0 = arith.constant 0 : index
    %c0_1 = arith.constant 0 : index
    %0 = vector.load %arg1[%c0, %c0_0, %c0_1] : memref<1x4x640xf32, #tpu.memory_space<vmem>>, vector<1x4x640xf32>
    %1 = vector.shape_cast %0 : vector<1x4x640xf32> to vector<4x640xf32>
    %2 = tpu.iota {dimensions = array<i32: 1>} : vector<1x384xi32>
    %false = arith.constant false
    %3 = vector.broadcast %false : i1 to vector<1x384xi1>
    %c0_i32 = arith.constant 0 : i32
    %4 = vector.broadcast %c0_i32 : i32 to vector<1x384xi32>
    %5 = arith.cmpi sge, %2, %4 : vector<1x384xi32>
    %c24_i32 = arith.constant 24 : i32
    %6 = vector.broadcast %c24_i32 : i32 to vector<1x384xi32>
    %7 = arith.cmpi slt, %2, %6 : vector<1x384xi32>
    %8 = arith.andi %5, %7 : vector<1x384xi1>
    %9 = arith.ori %3, %8 : vector<1x384xi1>
    %c192_i32 = arith.constant 192 : i32
    %10 = vector.broadcast %c192_i32 : i32 to vector<1x384xi32>
    %11 = arith.cmpi sge, %2, %10 : vector<1x384xi32>
    %c216_i32 = arith.constant 216 : i32
    %12 = vector.broadcast %c216_i32 : i32 to vector<1x384xi32>
    %13 = arith.cmpi slt, %2, %12 : vector<1x384xi32>
    %14 = arith.andi %11, %13 : vector<1x384xi1>
    %15 = arith.ori %9, %14 : vector<1x384xi1>
    %cst = arith.constant dense<true> : vector<1x384xi1>
    %16 = arith.xori %15, %cst : vector<1x384xi1>
    %17 = arith.extui %16 : vector<1x384xi1> to vector<1x384xi32>
    %18 = arith.sitofp %17 : vector<1x384xi32> to vector<1x384xf32>
    %19 = vector.extract_strided_slice %1 {offsets = [0, 104], sizes = [4, 384], strides = [1, 1]} : vector<4x640xf32> to vector<4x384xf32>
    %20 = vector.broadcast %18 : vector<1x384xf32> to vector<4x384xf32>
    %21 = arith.mulf %19, %20 : vector<4x384xf32>
    %c0_2 = arith.constant 0 : index
    %c0_3 = arith.constant 0 : index
    %22 = vector.load %arg4[%c0_2, %c0_3] : memref<36x384xf32, #tpu.memory_space<vmem>>, vector<4x384xf32>
    tpu.vector_store %arg4[%c0_2, %c0_3], %21 {strides = array<i32>} : memref<36x384xf32, #tpu.memory_space<vmem>>, vector<4x384xf32>,
    %23 = vector.extract_strided_slice %1 {offsets = [0, 105], sizes = [4, 384], strides = [1, 1]} : vector<4x640xf32> to vector<4x384xf32>
    %24 = vector.broadcast %18 : vector<1x384xf32> to vector<4x384xf32>
    %25 = arith.mulf %23, %24 : vector<4x384xf32>
    %c4 = arith.constant 4 : index
    %c0_4 = arith.constant 0 : index
    %26 = vector.load %arg4[%c4, %c0_4] : memref<36x384xf32, #tpu.memory_space<vmem>>, vector<4x384xf32>
    tpu.vector_store %arg4[%c4, %c0_4], %25 {strides = array<i32>} : memref<36x384xf32, #tpu.memory_space<vmem>>, vector<4x384xf32>,
    %27 = vector.extract_strided_slice %1 {offsets = [0, 106], sizes = [4, 384], strides = [1, 1]} : vector<4x640xf32> to vector<4x384xf32>
    %28 = vector.broadcast %18 : vector<1x384xf32> to vector<4x384xf32>
    %29 = arith.mulf %27, %28 : vector<4x384xf32>
    %c8 = arith.constant 8 : index
    %c0_5 = arith.constant 0 : index
    %30 = vector.load %arg4[%c8, %c0_5] : memref<36x384xf32, #tpu.memory_space<vmem>>, vector<4x384xf32>
    tpu.vector_store %arg4[%c8, %c0_5], %29 {strides = array<i32>} : memref<36x384xf32, #tpu.memory_space<vmem>>, vector<4x384xf32>,
    %31 = vector.extract_strided_slice %1 {offsets = [0, 128], sizes = [4, 384], strides = [1, 1]} : vector<4x640xf32> to vector<4x384xf32>
    %c12 = arith.constant 12 : index
    %c0_6 = arith.constant 0 : index
    %32 = vector.load %arg4[%c12, %c0_6] : memref<36x384xf32, #tpu.memory_space<vmem>>, vector<4x384xf32>
    tpu.vector_store %arg4[%c12, %c0_6], %31 {strides = array<i32>} : memref<36x384xf32, #tpu.memory_space<vmem>>, vector<4x384xf32>,
    %33 = vector.extract_strided_slice %1 {offsets = [0, 129], sizes = [4, 384], strides = [1, 1]} : vector<4x640xf32> to vector<4x384xf32>
    %c16 = arith.constant 16 : index
    %c0_7 = arith.constant 0 : index
    %34 = vector.load %arg4[%c16, %c0_7] : memref<36x384xf32, #tpu.memory_space<vmem>>, vector<4x384xf32>
    tpu.vector_store %arg4[%c16, %c0_7], %33 {strides = array<i32>} : memref<36x384xf32, #tpu.memory_space<vmem>>, vector<4x384xf32>,
    %35 = vector.extract_strided_slice %1 {offsets = [0, 130], sizes = [4, 384], strides = [1, 1]} : vector<4x640xf32> to vector<4x384xf32>
    %c20 = arith.constant 20 : index
    %c0_8 = arith.constant 0 : index
    %36 = vector.load %arg4[%c20, %c0_8] : memref<36x384xf32, #tpu.memory_space<vmem>>, vector<4x384xf32>
    tpu.vector_store %arg4[%c20, %c0_8], %35 {strides = array<i32>} : memref<36x384xf32, #tpu.memory_space<vmem>>, vector<4x384xf32>,
    %false_9 = arith.constant false
    %37 = vector.broadcast %false_9 : i1 to vector<1x384xi1>
    %c168_i32 = arith.constant 168 : i32
    %38 = vector.broadcast %c168_i32 : i32 to vector<1x384xi32>
    %39 = arith.cmpi sge, %2, %38 : vector<1x384xi32>
    %c192_i32_10 = arith.constant 192 : i32
    %40 = vector.broadcast %c192_i32_10 : i32 to vector<1x384xi32>
    %41 = arith.cmpi slt, %2, %40 : vector<1x384xi32>
    %42 = arith.andi %39, %41 : vector<1x384xi1>
    %43 = arith.ori %37, %42 : vector<1x384xi1>
    %c360_i32 = arith.constant 360 : i32
    %44 = vector.broadcast %c360_i32 : i32 to vector<1x384xi32>
    %45 = arith.cmpi sge, %2, %44 : vector<1x384xi32>
    %c384_i32 = arith.constant 384 : i32
    %46 = vector.broadcast %c384_i32 : i32 to vector<1x384xi32>
    %47 = arith.cmpi slt, %2, %46 : vector<1x384xi32>
    %48 = arith.andi %45, %47 : vector<1x384xi1>
    %49 = arith.ori %43, %48 : vector<1x384xi1>
    %cst_11 = arith.constant dense<true> : vector<1x384xi1>
    %50 = arith.xori %49, %cst_11 : vector<1x384xi1>
    %51 = arith.extui %50 : vector<1x384xi1> to vector<1x384xi32>
    %52 = arith.sitofp %51 : vector<1x384xi32> to vector<1x384xf32>
    %53 = vector.extract_strided_slice %1 {offsets = [0, 152], sizes = [4, 384], strides = [1, 1]} : vector<4x640xf32> to vector<4x384xf32>
    %54 = vector.broadcast %52 : vector<1x384xf32> to vector<4x384xf32>
    %55 = arith.mulf %53, %54 : vector<4x384xf32>
    %c24 = arith.constant 24 : index
    %c0_12 = arith.constant 0 : index
    %56 = vector.load %arg4[%c24, %c0_12] : memref<36x384xf32, #tpu.memory_space<vmem>>, vector<4x384xf32>
    tpu.vector_store %arg4[%c24, %c0_12], %55 {strides = array<i32>} : memref<36x384xf32, #tpu.memory_space<vmem>>, vector<4x384xf32>,
    %57 = vector.extract_strided_slice %1 {offsets = [0, 153], sizes = [4, 384], strides = [1, 1]} : vector<4x640xf32> to vector<4x384xf32>
    %58 = vector.broadcast %52 : vector<1x384xf32> to vector<4x384xf32>
    %59 = arith.mulf %57, %58 : vector<4x384xf32>
    %c28 = arith.constant 28 : index
    %c0_13 = arith.constant 0 : index
    %60 = vector.load %arg4[%c28, %c0_13] : memref<36x384xf32, #tpu.memory_space<vmem>>, vector<4x384xf32>
    tpu.vector_store %arg4[%c28, %c0_13], %59 {strides = array<i32>} : memref<36x384xf32, #tpu.memory_space<vmem>>, vector<4x384xf32>,
    %61 = vector.extract_strided_slice %1 {offsets = [0, 154], sizes = [4, 384], strides = [1, 1]} : vector<4x640xf32> to vector<4x384xf32>
    %62 = vector.broadcast %52 : vector<1x384xf32> to vector<4x384xf32>
    %63 = arith.mulf %61, %62 : vector<4x384xf32>
    %c32 = arith.constant 32 : index
    %c0_14 = arith.constant 0 : index
    %64 = vector.load %arg4[%c32, %c0_14] : memref<36x384xf32, #tpu.memory_space<vmem>>, vector<4x384xf32>
    tpu.vector_store %arg4[%c32, %c0_14], %63 {strides = array<i32>} : memref<36x384xf32, #tpu.memory_space<vmem>>, vector<4x384xf32>,
    %c0_15 = arith.constant 0 : index
    %c0_16 = arith.constant 0 : index
    %65 = vector.load %arg2[%c0_15, %c0_16] : memref<8x36xf32, #tpu.memory_space<vmem>>, vector<8x36xf32>
    %c0_17 = arith.constant 0 : index
    %c0_18 = arith.constant 0 : index
    %66 = vector.load %arg4[%c0_17, %c0_18] : memref<36x384xf32, #tpu.memory_space<vmem>>, vector<36x384xf32>
    %cst_19 = arith.constant dense<0.000000e+00> : vector<8x384xf32>
    %67 = tpu.matmul %65, %66, %cst_19 {dimension_numbers = #tpu.dot_dimension_numbers<[1], [0], [0], [1], [0, 0, 1, 1], [], []>} : vector<8x36xf32>, vector<36x384xf32>, vector<8x384xf32> -> vector<8x384xf32>
    %c0_20 = arith.constant 0 : index
    %c0_21 = arith.constant 0 : index
    %c0_22 = arith.constant 0 : index
    %68 = vector.load %arg3[%c0_20, %c0_21, %c0_22] : memref<1x8x384xf32, #tpu.memory_space<vmem>>, vector<1x8x384xf32>
    %69 = vector.shape_cast %68 : vector<1x8x384xf32> to vector<8x384xf32>
    %70 = vector.shape_cast %67 : vector<8x384xf32> to vector<1x8x384xf32>
    tpu.vector_store %arg3[%c0_20, %c0_21, %c0_22], %70 {strides = array<i32>} : memref<1x8x384xf32, #tpu.memory_space<vmem>>, vector<1x8x384xf32>,
    return
  }
  func.func @transform_0(%arg0: i32) -> (i32, i32, i32) {
    %c0_i32 = arith.constant 0 : i32
    %c0_i32_0 = arith.constant 0 : i32
    %c0_i32_1 = arith.constant 0 : i32
    return %arg0, %c0_i32, %c0_i32_0 : i32, i32, i32
  }
  func.func @transform_1(%arg0: i32) -> (i32, i32) {
    %c0_i32 = arith.constant 0 : i32
    %c0_i32_0 = arith.constant 0 : i32
    %c0_i32_1 = arith.constant 0 : i32
    return %c0_i32, %c0_i32_0 : i32, i32
  }
  func.func @transform_2(%arg0: i32) -> (i32, i32, i32) {
    %c0_i32 = arith.constant 0 : i32
    %c0_i32_0 = arith.constant 0 : i32
    %c0_i32_1 = arith.constant 0 : i32
    return %arg0, %c0_i32, %c0_i32_0 : i32, i32, i32
  }
}

</mosaic_0001>

<llo_original>
// kernel: focal_conv2d_forward.1
$region0: #{focal_conv2d_forward.1}
  #allocation0 [shape = 'u32[]', space=smem, size = 0x4, offset = 0x4, fixed_abs, tag = 'smem constant byte address 0x4 - core index']
  #allocation1 [shape = 'u32[144,128]{1,0:T(1,128)}', space=vmem, size = 0x12000, scoped, tag = 'internal scratch']
  #allocation2 [shape = 'f32[36,384]{1,0:T(8,128)}', space=vmem, size = 0xf000, scoped, tag = 'scratch operand']
  %s0 = inlined_call_operand.vmem [shape: f32[2,4,640], index: 0, kind: input, shape index: {}]
  %s1 = inlined_call_operand.vmem [shape: f32[8,36], index: 1, kind: input, shape index: {}]
  %s2 = inlined_call_operand.vmem [shape: f32[2,8,384], index: 2, kind: output, shape index: {}]
  %s3 = sld [smem:[#allocation0]]
  $region41: #{focal_conv2d_forward.1} parent=0
    _
  %s5 = ssub.s32 1, %s3
  %s6 = scalar_select 0, %s5, %s3
  loop: start=0, step=1, limit=4
  $region2: #{focal_conv2d_forward.1} parent=0 // loop_pre_header
    _
  $region3: #{focal_conv2d_forward.1} parent=0 // loop_header
    %s8 = sphi 0, %s12
    %p9 = scmp.ge.s32.totalorder %s8, 4
    %s18 = sphi 0, %s20
    %s21 = sphi 0, %s18
    %s22 = sphi 0, %s21
    %s38 = sphi 0, %s22
    %s42 = sphi 0, %s42
    %s44 = sphi 0, %s42
    %s45 = sphi 0, %s44
    %s59 = sphi 0, %s45
    %s65 = sphi 0, %s67
    %s68 = sphi 0, %s65
    %s69 = sphi 0, %s68
    %s85 = sphi 0, %s69
  $region4: #{focal_conv2d_forward.1} parent=0 // loop_header_branch
    %11 = sbr.rel (%p9) target = $region8
  $region5: #{focal_conv2d_forward.1} parent=0 // loop_body
    %s13 = ssub.s32 %s8, 1
    %s14 = ssub.s32 %s8, 2
    %s15 = sadd.s32 %s8, 1
    %s16 = ssub.s32 %s8, %s15
    %p17 = scmp.eq.s32.totalorder %s16, 0
    %s19 = sadd.s32 %s18, 1
    %s20 = scalar_select %p17, %s18, %s19
    %p23 = pneg %p17
    %p24 = scmp.eq.s32.totalorder %s8, 1
    %p25 = por %p23, %p24
    %p26 = scmp.ne.s32.totalorder %s18, %s21
    %p27 = scmp.eq.s32.totalorder %s8, 0
    %p28 = por %p26, %p27
    %p29 = scmp.ne.s32.totalorder %s18, %s21
    %p30 = scmp.eq.s32.totalorder %s13, 1
    %p31 = por %p29, %p30
    %p32 = scmp.ne.s32.totalorder %s21, %s22
    %p33 = scmp.eq.s32.totalorder %s13, 0
    %p34 = por %p32, %p33
    %p35 = scmp.ne.s32.totalorder %s21, %s22
    %p36 = scmp.eq.s32.totalorder %s14, 1
    %p37 = por %p35, %p36
    %p39 = scmp.ne.s32.totalorder %s22, %s38
    %p40 = scmp.eq.s32.totalorder %s14, 0
    %p41 = por %p39, %p40
    %s43 = sadd.s32 %s42, 1
    %p46 = scmp.eq.s32.totalorder %s8, 1
    %p47 = scmp.ne.s32.totalorder %s42, %s44
    %p48 = scmp.eq.s32.totalorder %s8, 0
    %p49 = por %p47, %p48
    %p50 = scmp.ne.s32.totalorder %s42, %s44
    %p51 = scmp.eq.s32.totalorder %s13, 1
    %p52 = por %p50, %p51
    %p53 = scmp.ne.s32.totalorder %s44, %s45
    %p54 = scmp.eq.s32.totalorder %s13, 0
    %p55 = por %p53, %p54
    %p56 = scmp.ne.s32.totalorder %s44, %s45
    %p57 = scmp.eq.s32.totalorder %s14, 1
    %p58 = por %p56, %p57
    %p60 = scmp.ne.s32.totalorder %s45, %s59
    %p61 = scmp.eq.s32.totalorder %s14, 0
    %p62 = por %p60, %p61
    %s63 = ssub.s32 %s8, %s15
    %p64 = scmp.eq.s32.totalorder %s63, 0
    %s66 = sadd.s32 %s65, 1
    %s67 = scalar_select %p64, %s65, %s66
    %p70 = pneg %p64
    %p71 = scmp.eq.s32.totalorder %s8, 1
    %p72 = por %p70, %p71
    %p73 = scmp.ne.s32.totalorder %s65, %s68
    %p74 = scmp.eq.s32.totalorder %s8, 0
    %p75 = por %p73, %p74
    %p76 = scmp.ne.s32.totalorder %s65, %s68
    %p77 = scmp.eq.s32.totalorder %s13, 1
    %p78 = por %p76, %p77
    %p79 = scmp.ne.s32.totalorder %s68, %s69
    %p80 = scmp.eq.s32.totalorder %s13, 0
    %p81 = por %p79, %p80
    %p82 = scmp.ne.s32.totalorder %s68, %s69
    %p83 = scmp.eq.s32.totalorder %s14, 1
    %p84 = por %p82, %p83
    %p86 = scmp.ne.s32.totalorder %s69, %s85
    %p87 = scmp.eq.s32.totalorder %s14, 0
    %p88 = por %p86, %p87
    %p89 = scmp.le.s32.totalorder 1, %s8
    %p90 = scmp.lt.s32.totalorder %s8, 3
    %p91 = pnand %p89, %p90
    %p92 = pneg %p91
    // Predicated region
    $region9: #{focal_conv2d_forward.1} parent=5 // pred_check
      _
    $region10: #{focal_conv2d_forward.1} parent=5 // pred_check_branch
      %94 = sbr.rel (%p91) target = $region12
    $region11: #{focal_conv2d_forward.1} parent=5 // pred_region
      %s95 = ssub.s32 %s8, 1
      // Predicated region
      $region13: #{focal_conv2d_forward.1} parent=11 // pred_check
        %p96 = pneg %p55
      $region14: #{focal_conv2d_forward.1} parent=11 // pred_check_branch
        %98 = sbr.rel (%p96) target = $region16
      $region15: #{focal_conv2d_forward.1} parent=11 // pred_region
        _
      $region16: #{focal_conv2d_forward.1} parent=11 // pred_fallthru
        _
    $region12: #{focal_conv2d_forward.1} parent=5 // pred_fallthru
      _
    %p99 = scmp.lt.s32.totalorder %s8, 2
    // Predicated region
    $region17: #{focal_conv2d_forward.1} parent=5 // pred_check
      %p100 = pneg %p99
    $region18: #{focal_conv2d_forward.1} parent=5 // pred_check_branch
      %102 = sbr.rel (%p100) target = $region20
    $region19: #{focal_conv2d_forward.1} parent=5 // pred_region
      // Predicated region
      $region21: #{focal_conv2d_forward.1} parent=19 // pred_check
        %p103 = pneg %p28
      $region22: #{focal_conv2d_forward.1} parent=19 // pred_check_branch
        %105 = sbr.rel (%p103) target = $region24
      $region23: #{focal_conv2d_forward.1} parent=19 // pred_region
        %p106 = scmp.lt.s32.totalorder %s8, 1
        %s107 = scalar_select %p106, %s8, 1
        %s108 = smul.addr %s107, 5
        %s109 = smul.addr %s108, 4
        %s110 = scalar_lea.vmem %s0, %s109
      $region24: #{focal_conv2d_forward.1} parent=19 // pred_fallthru
        _
    $region20: #{focal_conv2d_forward.1} parent=5 // pred_fallthru
      _
    %p111 = scmp.le.s32.totalorder 1, %s8
    %p112 = scmp.lt.s32.totalorder %s8, 3
    %p113 = pnand %p111, %p112
    %p114 = pneg %p113
    // Predicated region
    $region25: #{focal_conv2d_forward.1} parent=5 // pred_check
      _
    $region26: #{focal_conv2d_forward.1} parent=5 // pred_check_branch
      %116 = sbr.rel (%p113) target = $region28
    $region27: #{focal_conv2d_forward.1} parent=5 // pred_region
      %s117 = ssub.s32 %s8, 1
      %p118 = scmp.lt.s32.totalorder %s13, 1
      %s119 = scalar_select %p118, %s13, 1
      %s120 = smul.addr %s119, 5
      %s121 = smul.addr %s120, 4
      %s122 = scalar_lea.vmem %s0, %s121
      %p123 = pneg %p34
      %p124 = pneg %p31
      %p125 = pneg %p55
      %p126 = pneg %p52
      %p127 = pneg %p81
      %p128 = pneg %p78
      %p129 = scmp.lt.s32.totalorder %s13, 1
      %s130 = scalar_select %p129, %s13, 1
      %s131 = smul.addr %s130, 3
      %s132 = smul.addr %s131, 8
      %s133 = scalar_lea.vmem %s2, %s132
      %p134 = scmp.lt.s32.totalorder %s13, 1
      %s135 = scalar_select %p134, %s13, 1
      %s136 = smul.addr %s135, 5
      %s137 = smul.addr %s136, 4
      %s138 = scalar_lea.vmem %s0, %s137
      %p139 = scmp.lt.s32.totalorder %s13, 1
      %s140 = scalar_select %p139, %s13, 1
      %s141 = smul.addr %s140, 3
      %s142 = smul.addr %s141, 8
      %s143 = scalar_lea.vmem %s2, %s142
      %v144 = vld [vmem:[%s138] sm:$0xff]
      %v145 = vld [vmem:[%s138 + $0x8] sm:$0xff]
      %v146 = vld [vmem:[%s138 + $0x10] sm:$0xf]
      %v147 = vlaneseq
      %v148 = vand.u32 %v147, 127
      %v149 = vadd.s32 %v148, 128
      %v150 = vadd.s32 %v148, 256
      %vm151 = vcmp.ge.s32.totalorder %v148, 0
      %vm152 = vcmp.ge.s32.totalorder %v149, 0
      %vm153 = vcmp.ge.s32.totalorder %v150, 0
      %vm154 = vcmp.lt.s32.totalorder %v148, 24
      %vm155 = vcmp.lt.s32.totalorder %v149, 24
      %vm156 = vcmp.lt.s32.totalorder %v150, 24
      %vm157 = vmand %vm151, %vm154
      %vm158 = vmand %vm152, %vm155
      %vm159 = vmand %vm153, %vm156
      %vm160 = vcmp.ge.s32.totalorder %v148, 192
      %vm161 = vcmp.ge.s32.totalorder %v149, 192
      %vm162 = vcmp.ge.s32.totalorder %v150, 192
      %vm163 = vcmp.lt.s32.totalorder %v148, 216
      %vm164 = vcmp.lt.s32.totalorder %v149, 216
      %vm165 = vcmp.lt.s32.totalorder %v150, 216
      %vm166 = vmand %vm160, %vm163
      %vm167 = vmand %vm161, %vm164
      %vm168 = vmand %vm162, %vm165
      %vm169 = vmor %vm157, %vm166
      %vm170 = vmor %vm158, %vm167
      %vm171 = vmor %vm159, %vm168
      %vm172 = vmxor %vm169, 1
      %vm173 = vmxor %vm170, 1
      %vm174 = vmxor %vm171, 1
      %v175 = vsel %vm172, 1, 0
      %v176 = vsel %vm173, 1, 0
      %v177 = vsel %vm174, 1, 0
      %v178 = vcvt.s32.f32 %v175
      %v179 = vcvt.s32.f32 %v176
      %v180 = vcvt.s32.f32 %v177
      %v184 = vcombine.low %v178, %v179
      %185 = vrot.lane.b32.xlu0 %v184, 104
      %v186 = vpop.permute.xlu0 %185
      %187 = vrot.lane.b32.xlu0 %v180, 104
      %v188 = vpop.permute.xlu0 %187
      %v189 = vrot.slane %v186, 4
      %v190 = vrot.slane %v188, 4
      %vm191 = vcmask 850944
      %v192 = vsel %vm191, %v189, %v186
      %vm193 = vcmask 1043456
      %v194 = vsel %vm193, %v189, %v190
      %v195 = vsel %vm191, %v194, %v188
      %v198 = vmul.f32 %v144, %v192
      %v199 = vmul.f32 %v145, %v195
      %v202 = vcombine.high %v198, %v198
      %v203 = vcombine.high %v199, %v199
      %204 = vrot.lane.b32.xlu0 %v198, 24
      %v205 = vpop.permute.xlu0 %204
      %206 = vrot.lane.b32.xlu0 %v202, 24
      %v207 = vpop.permute.xlu0 %206
      %208 = vrot.lane.b32.xlu0 %v199, 24
      %v209 = vpop.permute.xlu0 %208
      %210 = vrot.lane.b32.xlu0 %v203, 24
      %v211 = vpop.permute.xlu0 %210
      %vm212 = vcmask 195584
      %v213 = vsel %vm212, %v205, %v207
      %v214 = vsel %vm212, %v207, %v209
      %v215 = vsel %vm212, %v209, %v211
      %219 = vst [vmem:[#allocation2] sm:$0xf] %v213
      %220 = vst [vmem:[#allocation2 + $0x8] sm:$0xf] %v214
      %221 = vst [vmem:[#allocation2 + $0x10] sm:$0xf] %v215
      %222 = vrot.lane.b32.xlu0 %v184, 105
      %v223 = vpop.permute.xlu0 %222
      %224 = vrot.lane.b32.xlu0 %v180, 105
      %v225 = vpop.permute.xlu0 %224
      %v226 = vrot.slane %v223, 4
      %v227 = vrot.slane %v225, 4
      %vm228 = vcmask 859136
      %v229 = vsel %vm228, %v226, %v223
      %v230 = vsel %vm193, %v226, %v227
      %v231 = vsel %vm228, %v230, %v225
      %v234 = vmul.f32 %v144, %v229
      %v235 = vmul.f32 %v145, %v231
      %v238 = vcombine.low %v234, %v234
      %v239 = vcombine.low %v235, %v235
      %240 = vrot.lane.b32.xlu0 %v238, 23
      %v241 = vpop.permute.xlu0 %240
      %242 = vrot.lane.b32.xlu0 %v234, 23
      %v243 = vpop.permute.xlu0 %242
      %244 = vrot.lane.b32.xlu0 %v239, 23
      %v245 = vpop.permute.xlu0 %244
      %246 = vrot.lane.b32.xlu0 %v235, 23
      %v247 = vpop.permute.xlu0 %246
      %vm248 = vcmask 187392
      %v249 = vsel %vm248, %v241, %v243
      %v250 = vsel %vm248, %v243, %v245
      %v251 = vsel %vm248, %v245, %v247
      %255 = vst [vmem:[#allocation2] sm:$0xf0] %v249
      %256 = vst [vmem:[#allocation2 + $0x8] sm:$0xf0] %v250
      %257 = vst [vmem:[#allocation2 + $0x10] sm:$0xf0] %v251
      %258 = vrot.lane.b32.xlu0 %v184, 106
      %v259 = vpop.permute.xlu0 %258
      %260 = vrot.lane.b32.xlu0 %v180, 106
      %v261 = vpop.permute.xlu0 %260
      %v262 = vrot.slane %v259, 4
      %v263 = vrot.slane %v261, 4
      %vm264 = vcmask 867328
      %v265 = vsel %vm264, %v262, %v259
      %v266 = vsel %vm193, %v262, %v263
      %v267 = vsel %vm264, %v266, %v261
      %v270 = vmul.f32 %v144, %v265
      %v271 = vmul.f32 %v145, %v267
      %v274 = vcombine.high %v270, %v270
      %v275 = vcombine.high %v271, %v271
      %276 = vrot.lane.b32.xlu0 %v270, 22
      %v277 = vpop.permute.xlu0 %276
      %278 = vrot.lane.b32.xlu0 %v274, 22
      %v279 = vpop.permute.xlu0 %278
      %280 = vrot.lane.b32.xlu0 %v271, 22
      %v281 = vpop.permute.xlu0 %280
      %282 = vrot.lane.b32.xlu0 %v275, 22
      %v283 = vpop.permute.xlu0 %282
      %vm284 = vcmask 179200
      %v285 = vsel %vm284, %v277, %v279
      %v286 = vsel %vm284, %v279, %v281
      %v287 = vsel %vm284, %v281, %v283
      %291 = vst [vmem:[#allocation2 + $0x18] sm:$0xf] %v285
      %292 = vst [vmem:[#allocation2 + $0x20] sm:$0xf] %v286
      %293 = vst [vmem:[#allocation2 + $0x28] sm:$0xf] %v287
      %v296 = vcombine.low %v145, %v145
      %298 = vst [vmem:[#allocation2 + $0x18] sm:$0xf0] %v144
      %299 = vst [vmem:[#allocation2 + $0x20] sm:$0xf0] %v296
      %300 = vst [vmem:[#allocation2 + $0x28] sm:$0xf0] %v145
      %v302 = vcombine.high %v144, %v144
      %v303 = vcombine.high %v145, %v145
      %304 = vrot.lane.b32.xlu0 %v302, 127
      %v305 = vpop.permute.xlu0 %304
      %306 = vrot.lane.b32.xlu0 %v145, 127
      %v307 = vpop.permute.xlu0 %306
      %308 = vrot.lane.b32.xlu0 %v303, 127
      %v309 = vpop.permute.xlu0 %308
      %310 = vrot.lane.b32.xlu0 %v146, 127
      %v311 = vpop.permute.xlu0 %310
      %vm312 = vcmask 1039360
      %v313 = vsel %vm312, %v305, %v307
      %v314 = vsel %vm312, %v307, %v309
      %v315 = vsel %vm312, %v309, %v311
      %319 = vst [vmem:[#allocation2 + $0x30] sm:$0xf] %v313
      %320 = vst [vmem:[#allocation2 + $0x38] sm:$0xf] %v314
      %321 = vst [vmem:[#allocation2 + $0x40] sm:$0xf] %v315
      %v322 = vcombine.low %v146, %v146
      %323 = vrot.lane.b32.xlu0 %v144, 126
      %v324 = vpop.permute.xlu0 %323
      %325 = vrot.lane.b32.xlu0 %v296, 126
      %v326 = vpop.permute.xlu0 %325
      %327 = vrot.lane.b32.xlu0 %v145, 126
      %v328 = vpop.permute.xlu0 %327
      %329 = vrot.lane.b32.xlu0 %v322, 126
      %v330 = vpop.permute.xlu0 %329
      %vm331 = vcmask 1031168
      %v332 = vsel %vm331, %v324, %v326
      %v333 = vsel %vm331, %v326, %v328
      %v334 = vsel %vm331, %v328, %v330
      %338 = vst [vmem:[#allocation2 + $0x30] sm:$0xf0] %v332
      %339 = vst [vmem:[#allocation2 + $0x38] sm:$0xf0] %v333
      %340 = vst [vmem:[#allocation2 + $0x40] sm:$0xf0] %v334
      %vm341 = vcmp.ge.s32.totalorder %v148, 168
      %vm342 = vcmp.ge.s32.totalorder %v149, 168
      %vm343 = vcmp.ge.s32.totalorder %v150, 168
      %vm344 = vcmp.lt.s32.totalorder %v148, 192
      %vm345 = vcmp.lt.s32.totalorder %v149, 192
      %vm346 = vcmp.lt.s32.totalorder %v150, 192
      %vm347 = vmand %vm341, %vm344
      %vm348 = vmand %vm342, %vm345
      %vm349 = vmand %vm343, %vm346
      %vm350 = vcmp.ge.s32.totalorder %v148, 360
      %vm351 = vcmp.ge.s32.totalorder %v149, 360
      %vm352 = vcmp.ge.s32.totalorder %v150, 360
      %vm353 = vcmp.lt.s32.totalorder %v148, 384
      %vm354 = vcmp.lt.s32.totalorder %v149, 384
      %vm355 = vcmp.lt.s32.totalorder %v150, 384
      %vm356 = vmand %vm350, %vm353
      %vm357 = vmand %vm351, %vm354
      %vm358 = vmand %vm352, %vm355
      %vm359 = vmor %vm347, %vm356
      %vm360 = vmor %vm348, %vm357
      %vm361 = vmor %vm349, %vm358
      %vm362 = vmxor %vm359, 1
      %vm363 = vmxor %vm360, 1
      %vm364 = vmxor %vm361, 1
      %v365 = vsel %vm362, 1, 0
      %v366 = vsel %vm363, 1, 0
      %v367 = vsel %vm364, 1, 0
      %v368 = vcvt.s32.f32 %v365
      %v369 = vcvt.s32.f32 %v366
      %v370 = vcvt.s32.f32 %v367
      %371 = vrot.lane.b32.xlu0 %v144, 104
      %v372 = vpop.permute.xlu0 %371
      %373 = vrot.lane.b32.xlu0 %v145, 104
      %v374 = vpop.permute.xlu0 %373
      %375 = vrot.lane.b32.xlu0 %v146, 104
      %v376 = vpop.permute.xlu0 %375
      %v377 = vrot.slane %v372, 4
      %v378 = vrot.slane %v374, 4
      %v379 = vsel %vm193, %v377, %v378
      %v380 = vsel %vm191, %v379, %v374
      %v381 = vsel %vm191, %v378, %v376
      %v386 = vcombine.low %v368, %v369
      %v388 = vmul.f32 %v380, %v386
      %v389 = vmul.f32 %v381, %v370
      %v391 = vcombine.high %v388, %v388
      %393 = vst [vmem:[#allocation2 + $0x48] sm:$0xf] %v388
      %394 = vst [vmem:[#allocation2 + $0x50] sm:$0xf] %v391
      %395 = vst [vmem:[#allocation2 + $0x58] sm:$0xf] %v389
      %396 = vrot.lane.b32.xlu0 %v144, 103
      %v397 = vpop.permute.xlu0 %396
      %398 = vrot.lane.b32.xlu0 %v145, 103
      %v399 = vpop.permute.xlu0 %398
      %400 = vrot.lane.b32.xlu0 %v146, 103
      %v401 = vpop.permute.xlu0 %400
      %v402 = vrot.slane %v397, 4
      %v403 = vrot.slane %v399, 4
      %v404 = vsel %vm193, %v402, %v403
      %vm405 = vcmask 842752
      %v406 = vsel %vm405, %v404, %v399
      %v407 = vsel %vm405, %v403, %v401
      %v410 = vmul.f32 %v406, %v386
      %v411 = vmul.f32 %v407, %v370
      %v414 = vcombine.low %v410, %v410
      %v415 = vcombine.low %v411, %v411
      %418 = vst [vmem:[#allocation2 + $0x48] sm:$0xf0] %v414
      %419 = vst [vmem:[#allocation2 + $0x50] sm:$0xf0] %v410
      %420 = vst [vmem:[#allocation2 + $0x58] sm:$0xf0] %v415
      %421 = vrot.lane.b32.xlu0 %v144, 102
      %v422 = vpop.permute.xlu0 %421
      %423 = vrot.lane.b32.xlu0 %v145, 102
      %v424 = vpop.permute.xlu0 %423
      %425 = vrot.lane.b32.xlu0 %v146, 102
      %v426 = vpop.permute.xlu0 %425
      %v427 = vrot.slane %v422, 4
      %v428 = vrot.slane %v424, 4
      %v429 = vsel %vm193, %v427, %v428
      %vm430 = vcmask 834560
      %v431 = vsel %vm430, %v429, %v424
      %v432 = vsel %vm430, %v428, %v426
      %v435 = vmul.f32 %v431, %v386
      %v436 = vmul.f32 %v432, %v370
      %v438 = vcombine.high %v435, %v435
      %440 = vst [vmem:[#allocation2 + $0x60] sm:$0xf] %v435
      %441 = vst [vmem:[#allocation2 + $0x68] sm:$0xf] %v438
      %442 = vst [vmem:[#allocation2 + $0x70] sm:$0xf] %v436
      %v443 = vld [vmem:[%s1] sm:$0xff]
      %v444 = vld [vmem:[#allocation2] sm:$0xff]
      %v445 = vld [vmem:[#allocation2 + $0x8] sm:$0xff]
      %v446 = vld [vmem:[#allocation2 + $0x10] sm:$0xff]
      %v447 = vld [vmem:[#allocation2 + $0x18] sm:$0xff]
      %v448 = vld [vmem:[#allocation2 + $0x20] sm:$0xff]
      %v449 = vld [vmem:[#allocation2 + $0x28] sm:$0xff]
      %v450 = vld [vmem:[#allocation2 + $0x30] sm:$0xff]
      %v451 = vld [vmem:[#allocation2 + $0x38] sm:$0xff]
      %v452 = vld [vmem:[#allocation2 + $0x40] sm:$0xff]
      %v453 = vld [vmem:[#allocation2 + $0x48] sm:$0xff]
      %v454 = vld [vmem:[#allocation2 + $0x50] sm:$0xff]
      %v455 = vld [vmem:[#allocation2 + $0x58] sm:$0xff]
      %v456 = vld [vmem:[#allocation2 + $0x60] sm:$0xf]
      %v457 = vld [vmem:[#allocation2 + $0x68] sm:$0xf]
      %v458 = vld [vmem:[#allocation2 + $0x70] sm:$0xf]
      %vm459 = vcmask 293888
      %v461 = vsel %vm459, %v443, 0
      %v464 = vsel %vm193, %v456, 0
      %v467 = vsel %vm193, %v457, 0
      %v470 = vsel %vm193, %v458, 0
      %472 = vmatprep.subr.mxu0 0.0
      %473 = vmatpush1.msra.mxu0 0.0
      %474 = vmatprep.subr.mxu0 0.0
      %475 = vmatpush1.msra.mxu0 0.0
      %476 = vmatprep.subr.mxu0 0.0
      %477 = vmatpush1.msra.mxu0 0.0
      %478 = vmatprep.subr.mxu0 0.0
      %479 = vmatpush1.msra.mxu0 0.0
      %480 = vmatprep.subr.mxu0 0.0
      %481 = vmatpush1.msra.mxu0 0.0
      %482 = vmatprep.subr.mxu0 0.0
      %483 = vmatpush1.msra.mxu0 0.0
      %484 = vmatprep.subr.mxu0 0.0
      %485 = vmatpush1.msra.mxu0 0.0
      %486 = vmatprep.subr.mxu0 0.0
      %487 = vmatpush1.msra.mxu0 0.0
      %488 = vmatprep.subr.mxu0 0.0
      %489 = vmatpush1.msra.mxu0 0.0
      %490 = vmatprep.subr.mxu0 0.0
      %491 = vmatpush1.msra.mxu0 0.0
      %492 = vmatprep.subr.mxu0 0.0
      %493 = vmatpush1.msra.mxu0 0.0
      %494 = vmatprep.subr.mxu0 %v467
      %495 = vmatpush1.msra.mxu0 %v464
      %496 = vmatprep.subr.mxu0 %v454
      %497 = vmatpush1.msra.mxu0 %v453
      %498 = vmatprep.subr.mxu0 %v451
      %499 = vmatpush1.msra.mxu0 %v450
      %500 = vmatprep.subr.mxu0 %v448
      %501 = vmatpush1.msra.mxu0 %v447
      %502 = vmatprep.subr.mxu0 %v445
      %503 = vmatpush1.msra.mxu0 %v444
      %504 = vmatprep.subr.mxu0 0.0
      %505 = vmatpush2.msra.mxu0 0.0
      %506 = vmatprep.subr.mxu0 0.0
      %507 = vmatpush2.msra.mxu0 0.0
      %508 = vmatprep.subr.mxu0 0.0
      %509 = vmatpush2.msra.mxu0 0.0
      %510 = vmatprep.subr.mxu0 0.0
      %511 = vmatpush2.msra.mxu0 0.0
      %512 = vmatprep.subr.mxu0 0.0
      %513 = vmatpush2.msra.mxu0 0.0
      %514 = vmatprep.subr.mxu0 0.0
      %515 = vmatpush2.msra.mxu0 0.0
      %516 = vmatprep.subr.mxu0 0.0
      %517 = vmatpush2.msra.mxu0 0.0
      %518 = vmatprep.subr.mxu0 0.0
      %519 = vmatpush2.msra.mxu0 0.0
      %520 = vmatprep.subr.mxu0 0.0
      %521 = vmatpush2.msra.mxu0 0.0
      %522 = vmatprep.subr.mxu0 0.0
      %523 = vmatpush2.msra.mxu0 0.0
      %524 = vmatprep.subr.mxu0 0.0
      %525 = vmatpush2.msra.mxu0 0.0
      %526 = vmatprep.subr.mxu0 0.0
      %527 = vmatpush2.msra.mxu0 0.0
      %528 = vmatprep.subr.mxu0 0.0
      %529 = vmatpush2.msra.mxu0 0.0
      %530 = vmatprep.subr.mxu0 0.0
      %531 = vmatpush2.msra.mxu0 0.0
      %532 = vmatprep.subr.mxu0 0.0
      %533 = vmatpush2.msra.mxu0 0.0
      %534 = vmatprep.subr.mxu0 0.0
      %535 = vmatpush2.msra.mxu0 0.0
      %536 = vmatprep.mubr.f32.mxu0 0.0
      %537 = vmatmul.mubr.f32.gmra.mxu0 %v461
      %v538 = vpop.f32.mrf.mxu0
      %v539 = vadd.f32 0.0, %v538
      %v540 = vpop.f32.mrf.mxu0
      %v541 = vadd.f32 0.0, %v540
      %542 = vdwg.mxu0
      %543 = vmatprep.subr.mxu0 0.0
      %544 = vmatpush1.msra.mxu0 0.0
      %545 = vmatprep.subr.mxu0 0.0
      %546 = vmatpush1.msra.mxu0 0.0
      %547 = vmatprep.subr.mxu0 0.0
      %548 = vmatpush1.msra.mxu0 0.0
      %549 = vmatprep.subr.mxu0 0.0
      %550 = vmatpush1.msra.mxu0 0.0
      %551 = vmatprep.subr.mxu0 0.0
      %552 = vmatpush1.msra.mxu0 0.0
      %553 = vmatprep.subr.mxu0 0.0
      %554 = vmatpush1.msra.mxu0 0.0
      %555 = vmatprep.subr.mxu0 0.0
      %556 = vmatpush1.msra.mxu0 0.0
      %557 = vmatprep.subr.mxu0 0.0
      %558 = vmatpush1.msra.mxu0 0.0
      %559 = vmatprep.subr.mxu0 0.0
      %560 = vmatpush1.msra.mxu0 0.0
      %561 = vmatprep.subr.mxu0 0.0
      %562 = vmatpush1.msra.mxu0 0.0
      %563 = vmatprep.subr.mxu0 0.0
      %564 = vmatpush1.msra.mxu0 0.0
      %565 = vmatprep.subr.mxu0 0.0
      %566 = vmatpush1.msra.mxu0 %v470
      %567 = vmatprep.subr.mxu0 0.0
      %568 = vmatpush1.msra.mxu0 %v455
      %569 = vmatprep.subr.mxu0 0.0
      %570 = vmatpush1.msra.mxu0 %v452
      %571 = vmatprep.subr.mxu0 0.0
      %572 = vmatpush1.msra.mxu0 %v449
      %573 = vmatprep.subr.mxu0 0.0
      %574 = vmatpush1.msra.mxu0 %v446
      %575 = vmatprep.subr.mxu0 0.0
      %576 = vmatpush2.msra.mxu0 0.0
      %577 = vmatprep.subr.mxu0 0.0
      %578 = vmatpush2.msra.mxu0 0.0
      %579 = vmatprep.subr.mxu0 0.0
      %580 = vmatpush2.msra.mxu0 0.0
      %581 = vmatprep.subr.mxu0 0.0
      %582 = vmatpush2.msra.mxu0 0.0
      %583 = vmatprep.subr.mxu0 0.0
      %584 = vmatpush2.msra.mxu0 0.0
      %585 = vmatprep.subr.mxu0 0.0
      %586 = vmatpush2.msra.mxu0 0.0
      %587 = vmatprep.subr.mxu0 0.0
      %588 = vmatpush2.msra.mxu0 0.0
      %589 = vmatprep.subr.mxu0 0.0
      %590 = vmatpush2.msra.mxu0 0.0
      %591 = vmatprep.subr.mxu0 0.0
      %592 = vmatpush2.msra.mxu0 0.0
      %593 = vmatprep.subr.mxu0 0.0
      %594 = vmatpush2.msra.mxu0 0.0
      %595 = vmatprep.subr.mxu0 0.0
      %596 = vmatpush2.msra.mxu0 0.0
      %597 = vmatprep.subr.mxu0 0.0
      %598 = vmatpush2.msra.mxu0 0.0
      %599 = vmatprep.subr.mxu0 0.0
      %600 = vmatpush2.msra.mxu0 0.0
      %601 = vmatprep.subr.mxu0 0.0
      %602 = vmatpush2.msra.mxu0 0.0
      %603 = vmatprep.subr.mxu0 0.0
      %604 = vmatpush2.msra.mxu0 0.0
      %605 = vmatprep.subr.mxu0 0.0
      %606 = vmatpush2.msra.mxu0 0.0
      %607 = vmatprep.mubr.f32.mxu0 0.0
      %608 = vmatmul.mubr.f32.gmra.mxu0 %v461
      %v609 = vpop.f32.mrf.mxu0
      %v610 = vadd.f32 0.0, %v609
      %v611 = vpop.f32.mrf.mxu0
      %612 = vdwg.mxu0
      %613 = vst [vmem:[%s143] sm:$0xff] %v539
      %614 = vst [vmem:[%s143 + $0x8] sm:$0xff] %v541
      %615 = vst [vmem:[%s143 + $0x10] sm:$0xff] %v610
      %p616 = scmp.lt.s32.totalorder %s13, 1
      %s617 = scalar_select %p616, %s13, 1
      %s618 = smul.addr %s617, 3
      %s619 = smul.addr %s618, 8
      %s620 = scalar_lea.vmem %s2, %s619
      // Predicated region
      $region29: #{focal_conv2d_forward.1} parent=27 // pred_check
        %p621 = pneg %p78
      $region30: #{focal_conv2d_forward.1} parent=27 // pred_check_branch
        %623 = sbr.rel (%p621) target = $region32
      $region31: #{focal_conv2d_forward.1} parent=27 // pred_region
        _
      $region32: #{focal_conv2d_forward.1} parent=27 // pred_fallthru
        _
    $region28: #{focal_conv2d_forward.1} parent=5 // pred_fallthru
      _
    %p624 = scmp.le.s32.totalorder 2, %s8
    // Predicated region
    $region33: #{focal_conv2d_forward.1} parent=5 // pred_check
      %p625 = pneg %p624
    $region34: #{focal_conv2d_forward.1} parent=5 // pred_check_branch
      %627 = sbr.rel (%p625) target = $region36
    $region35: #{focal_conv2d_forward.1} parent=5 // pred_region
      %s628 = ssub.s32 %s8, 2
      // Predicated region
      $region37: #{focal_conv2d_forward.1} parent=35 // pred_check
        %p629 = pneg %p84
      $region38: #{focal_conv2d_forward.1} parent=35 // pred_check_branch
        %631 = sbr.rel (%p629) target = $region40
      $region39: #{focal_conv2d_forward.1} parent=35 // pred_region
        %p632 = scmp.lt.s32.totalorder %s14, 1
        %s633 = scalar_select %p632, %s14, 1
        %s634 = smul.addr %s633, 3
        %s635 = smul.addr %s634, 8
        %s636 = scalar_lea.vmem %s2, %s635
      $region40: #{focal_conv2d_forward.1} parent=35 // pred_fallthru
        _
    $region36: #{focal_conv2d_forward.1} parent=5 // pred_fallthru
      _
  $region6: #{focal_conv2d_forward.1} parent=0 // loop_footer
    %s12 = sadd.s32 1, %s8
  $region7: #{focal_conv2d_forward.1} parent=0 // loop_footer_branch
    %7 = sbr.rel target = $region3
  $region8: #{focal_conv2d_forward.1} parent=0 // loop_exit
    _

</llo_original>
